<compile_context>
chip_gen: v7x
topology: tpu7x:2x2x1
jax: 0.10.0
libtpu: 0.0.40
codegen_flags: <defaults>
</compile_context>

<pallas_src>
import jax
import jax.numpy as jnp
from jax.experimental import pallas as pl
from jax.experimental.pallas import tpu as pltpu


def _round_up(v: int, m: int) -> int:
    return ((v + m - 1) // m) * m


def _vmem_capacity_bytes(default: int = 64 * 1024 * 1024) -> int:
    """Physical VMEM of the local TPU; conservative fallback if unknown."""
    try:
        cap = getattr(pltpu.get_tpu_info(), "vmem_capacity_bytes", None)
        if cap:
            return int(cap)
    except Exception:
        pass
    return default


def _vmem_fits(tm: int, tn: int, tk: int, budget: int) -> bool:
    """Double-buffered per-step VMEM footprint of one grid step."""
    per_step = (
        tm * tk * 2        # x as matmul operand (bf16)
        + tk * tn * 2      # W (bf16)
        + tn * 4           # bias (f32)
        + tm * tn * 2      # x as residual (bf16)
        + tm * tn * 4      # output block / f32 accumulator
    )
    return 2 * per_step <= budget


def residual_linear_kernel(x_mm_ref, w_ref, b_ref, x_res_ref, o_ref):
    """Grid = (M tiles, N tiles, K tiles); K is the innermost (reduction) axis.

    out[i, j] = sum_k x[i, k] @ W[k, j] + b[j] + x[i, j]

    The output block index (i, j) is k-invariant, so the f32 output block stays
    VMEM-resident across the K sweep and is used directly as the accumulator.
    """
    k = pl.program_id(2)

    part = jnp.dot(x_mm_ref[...], w_ref[...], preferred_element_type=jnp.float32)

    @pl.when(k == 0)
    def _():
        # Seed the accumulator with bias + first partial product (applied once).
        o_ref[...] = part + b_ref[...]

    @pl.when(k > 0)
    def _():
        o_ref[...] += part

    @pl.when(k == pl.num_programs(2) - 1)
    def _():
        # Residual added exactly once, on the last K step.
        o_ref[...] += x_res_ref[...].astype(jnp.float32)


def residual_forward(x, w, b, *, tile_m=None, tile_n=None, tile_k=None,
                     matmul_dtype=jnp.bfloat16):
    """out = x @ W + b + x  (fn = Linear(hidden, hidden) inside Residual).

    x: (batch, seq, hidden); w: (hidden, hidden); b: (hidden,).
    """
    batch, seq, hidden = x.shape
    M, D = batch * seq, hidden

    # Lane-dense hidden: pad D to a multiple of 128.
    Dp = _round_up(max(D, 128), 128)

    # Generation-aware VMEM limit (96 MiB on 128 MiB v5e/v6e, 48 MiB on 64 MiB
    # v7x); tiles are sized against ~85% of that for compiler headroom.
    vmem_limit = (3 * _vmem_capacity_bytes()) // 4
    budget = (vmem_limit * 85) // 100

    # --- tile selection --------------------------------------------------
    if tile_n is None:
        tile_n = Dp if Dp <= 512 else next(
            t for t in (512, 256, 128) if Dp % t == 0)
    if tile_k is None:
        # Full reduction in one grid step when it fits: x fetched once per M
        # tile; W fetched exactly once per call when additionally tile_n == Dp.
        want_tm = min(1024, _round_up(M, 8))
        if _vmem_fits(min(want_tm, 256), tile_n, Dp, budget):
            tile_k = Dp
        else:
            tile_k = next(t for t in (512, 256, 128) if Dp % t == 0)
    if tile_m is None:
        # Largest row tile (<=1024, multiple of 8) that fits the VMEM budget.
        tm = min(1024, _round_up(M, 8))
        while tm > 8 and not _vmem_fits(tm, tile_n, tile_k, budget):
            tm = max(8, _round_up(tm // 2, 8))
        tile_m = tm
        # Keep Mp padding waste under ~25% for ragged M.
        while tile_m > 128 and 4 * (_round_up(M, tile_m) - M) > _round_up(M, tile_m):
            tile_m = _round_up(tile_m // 2, 8)
        # Guarantee >= 2 parallel output tiles (both v7x TensorCores get work).
        if (_round_up(M, tile_m) // tile_m) * (Dp // tile_n) == 1:
            if tile_m >= 16:
                tile_m = max(8, _round_up(tile_m // 2, 8))
            elif tile_n >= 256:
                tile_n //= 2

    Mp = _round_up(M, tile_m)
    n_i, n_j, n_k = Mp // tile_m, Dp // tile_n, Dp // tile_k

    # --- prepare operands (skip pad/cast passes when they are no-ops) -----
    x2d = x.reshape(M, D)
    x_mm = x2d if x2d.dtype == matmul_dtype else x2d.astype(matmul_dtype)
    if (Mp, Dp) != (M, D):
        x_mm = jnp.pad(x_mm, ((0, Mp - M), (0, Dp - D)))
    w_mm = w if w.dtype == matmul_dtype else w.astype(matmul_dtype)
    if Dp != D:
        w_mm = jnp.pad(w_mm, ((0, Dp - D), (0, Dp - D)))
    b_f32 = b if b.dtype == jnp.float32 else b.astype(jnp.float32)
    if Dp != D:
        b_f32 = jnp.pad(b_f32, (0, Dp - D))
    b2d = b_f32.reshape(1, Dp)

    # Advisory cost estimate for XLA scheduling around the custom call.
    itm, itw = x_mm.dtype.itemsize, w_mm.dtype.itemsize
    weight_resident = (n_j == 1 and n_k == 1)
    cost = pl.CostEstimate(
        flops=2 * Mp * Dp * Dp + 2 * Mp * Dp,
        transcendentals=0,
        bytes_accessed=int(
            (n_j if n_k > 1 else 1) * Mp * Dp * itm       # x, matmul operand
            + (1 if weight_resident else n_i) * Dp * Dp * itw  # W
            + Mp * Dp * itm                                # x, residual operand
            + Mp * Dp * 4                                  # f32 output
            + Dp * 4                                       # bias
        ),
    )

    # TODO(synk): consider pipeline_mode=pl.Buffered(1) on the W spec for a
    # weight-resident hidden<=~4096 variant on 128 MiB parts, and Buffered(3)
    # on the streamed operands if a profile shows exposed K-axis DMA; omitted
    # here to keep the kernel portable across v5e/v6e/v7x.
    out2d = pl.pallas_call(
        residual_linear_kernel,
        out_shape=jax.ShapeDtypeStruct((Mp, Dp), jnp.float32),
        grid_spec=pltpu.PrefetchScalarGridSpec(
            num_scalar_prefetch=0,
            grid=(n_i, n_j, n_k),
            in_specs=[
                # x as matmul operand: (tm, tk) blocks over (i, k)
                pl.BlockSpec((tile_m, tile_k), lambda i, j, k: (i, k)),
                # W: (tk, tn) blocks over (k, j)
                pl.BlockSpec((tile_k, tile_n), lambda i, j, k: (k, j)),
                # bias: (1, tn) block over j (constant over i, k)
                pl.BlockSpec((1, tile_n), lambda i, j, k: (0, j)),
                # the SAME bf16 x array reused as residual: (tm, tn) over (i, j)
                pl.BlockSpec((tile_m, tile_n), lambda i, j, k: (i, j)),
            ],
            out_specs=pl.BlockSpec((tile_m, tile_n), lambda i, j, k: (i, j)),
        ),
        compiler_params=pltpu.CompilerParams(
            dimension_semantics=("parallel", "parallel", "arbitrary"),
            vmem_limit_bytes=int(vmem_limit),
        ),
        cost_estimate=cost,
    )(x_mm, w_mm, b2d, x_mm)

    # Strip padding, restore (batch, seq, hidden); cast only if x wasn't f32.
    out2d = out2d[:M, :D]
    if x.dtype != jnp.float32:
        out2d = out2d.astype(x.dtype)
    return out2d.reshape(batch, seq, hidden)


if __name__ == "__main__":
    batch, seq, hidden = 2, 8, 32

    key = jax.random.PRNGKey(0)
    kx, kw, kb = jax.random.split(key, 3)

    x = jax.random.normal(kx, (batch, seq, hidden), dtype=jnp.float32)
    # Deterministic parameters for fn = Linear(hidden, hidden)
    w = jax.random.normal(kw, (hidden, hidden), dtype=jnp.float32) * 0.02
    b = jax.random.normal(kb, (hidden,), dtype=jnp.float32) * 0.02

    out = jax.block_until_ready(residual_forward(x, w, b))

    # Reference with the same numerics as the kernel: bf16 matmul operands,
    # f32 accumulate, bf16 residual stream promoted back to f32.
    x_bf = x.astype(jnp.bfloat16)
    ref = (
        jnp.einsum(
            "bsh,hd->bsd", x_bf, w.astype(jnp.bfloat16),
            preferred_element_type=jnp.float32,
        )
        + b
        + x_bf.astype(jnp.float32)
    )
    assert out.shape == x.shape
    assert jnp.allclose(out, ref, atol=1e-3, rtol=1e-3), "mismatch vs reference"

    print("KERNEL_OK")
</pallas_src>

<mosaic_0001>
module attributes {stable_mosaic.version = 11 : i64} {
  func.func @residual_linear_kernel(%arg0: i32, %arg1: i32, %arg2: i32, %arg3: memref<8x128xbf16, #tpu.memory_space<vmem>>, %arg4: memref<128x128xbf16, #tpu.memory_space<vmem>>, %arg5: memref<1x128xf32, #tpu.memory_space<vmem>>, %arg6: memref<8x128xbf16, #tpu.memory_space<vmem>>, %arg7: memref<8x128xf32, #tpu.memory_space<vmem>>) attributes {dimension_semantics = [#tpu.dimension_semantics<parallel>, #tpu.dimension_semantics<parallel>, #tpu.dimension_semantics<arbitrary>], iteration_bounds = array<i64: 2, 1, 1>, scalar_prefetch = 0 : i64, scratch_operands = 0 : i64, tpu.core_type = #tpu.core_type<tc>, window_params = [{transform_indices = @transform_0, window_bounds = array<i64: 8, 128>}, {transform_indices = @transform_1, window_bounds = array<i64: 128, 128>}, {transform_indices = @transform_2, window_bounds = array<i64: 1, 128>}, {transform_indices = @transform_3, window_bounds = array<i64: 8, 128>}, {transform_indices = @transform_4, window_bounds = array<i64: 8, 128>}]} {
    %c0 = arith.constant 0 : index
    %c0_0 = arith.constant 0 : index
    %0 = vector.load %arg3[%c0, %c0_0] : memref<8x128xbf16, #tpu.memory_space<vmem>>, vector<8x128xbf16>
    %c0_1 = arith.constant 0 : index
    %c0_2 = arith.constant 0 : index
    %1 = vector.load %arg4[%c0_1, %c0_2] : memref<128x128xbf16, #tpu.memory_space<vmem>>, vector<128x128xbf16>
    %cst = arith.constant dense<0.000000e+00> : vector<8x128xf32>
    %2 = tpu.matmul %0, %1, %cst {dimension_numbers = #tpu.dot_dimension_numbers<[1], [0], [0], [1], [0, 0, 1, 1], [], []>} : vector<8x128xbf16>, vector<128x128xbf16>, vector<8x128xf32> -> vector<8x128xf32>
    %c0_i32 = arith.constant 0 : i32
    %3 = arith.cmpi eq, %arg2, %c0_i32 : i32
    %4 = arith.extui %3 : i1 to i32
    %c0_i32_3 = arith.constant 0 : i32
    %5 = arith.cmpi ne, %4, %c0_i32_3 : i32
    scf.if %5 {
      %c0_8 = arith.constant 0 : index
      %c0_9 = arith.constant 0 : index
      %12 = vector.load %arg5[%c0_8, %c0_9] : memref<1x128xf32, #tpu.memory_space<vmem>>, vector<1x128xf32>
      %13 = vector.broadcast %12 : vector<1x128xf32> to vector<8x128xf32>
      %14 = arith.addf %2, %13 : vector<8x128xf32>
      %c0_10 = arith.constant 0 : index
      %c0_11 = arith.constant 0 : index
      %15 = vector.load %arg7[%c0_10, %c0_11] : memref<8x128xf32, #tpu.memory_space<vmem>>, vector<8x128xf32>
      tpu.vector_store %arg7[%c0_10, %c0_11], %14 {strides = array<i32>} : memref<8x128xf32, #tpu.memory_space<vmem>>, vector<8x128xf32>,
    } else {
    }
    %c0_i32_4 = arith.constant 0 : i32
    %6 = arith.cmpi sgt, %arg2, %c0_i32_4 : i32
    %7 = arith.extui %6 : i1 to i32
    %c0_i32_5 = arith.constant 0 : i32
    %8 = arith.cmpi ne, %7, %c0_i32_5 : i32
    scf.if %8 {
      %c0_8 = arith.constant 0 : index
      %c0_9 = arith.constant 0 : index
      %12 = vector.load %arg7[%c0_8, %c0_9] : memref<8x128xf32, #tpu.memory_space<vmem>>, vector<8x128xf32>
      %13 = arith.addf %12, %2 : vector<8x128xf32>
      %c0_10 = arith.constant 0 : index
      %c0_11 = arith.constant 0 : index
      %14 = vector.load %arg7[%c0_10, %c0_11] : memref<8x128xf32, #tpu.memory_space<vmem>>, vector<8x128xf32>
      tpu.vector_store %arg7[%c0_10, %c0_11], %13 {strides = array<i32>} : memref<8x128xf32, #tpu.memory_space<vmem>>, vector<8x128xf32>,
    } else {
    }
    %c0_i32_6 = arith.constant 0 : i32
    %9 = arith.cmpi eq, %arg2, %c0_i32_6 : i32
    %10 = arith.extui %9 : i1 to i32
    %c0_i32_7 = arith.constant 0 : i32
    %11 = arith.cmpi ne, %10, %c0_i32_7 : i32
    scf.if %11 {
      %c0_8 = arith.constant 0 : index
      %c0_9 = arith.constant 0 : index
      %12 = vector.load %arg7[%c0_8, %c0_9] : memref<8x128xf32, #tpu.memory_space<vmem>>, vector<8x128xf32>
      %c0_10 = arith.constant 0 : index
      %c0_11 = arith.constant 0 : index
      %13 = vector.load %arg6[%c0_10, %c0_11] : memref<8x128xbf16, #tpu.memory_space<vmem>>, vector<8x128xbf16>
      %14 = arith.extf %13 : vector<8x128xbf16> to vector<8x128xf32>
      %15 = arith.addf %12, %14 : vector<8x128xf32>
      %c0_12 = arith.constant 0 : index
      %c0_13 = arith.constant 0 : index
      %16 = vector.load %arg7[%c0_12, %c0_13] : memref<8x128xf32, #tpu.memory_space<vmem>>, vector<8x128xf32>
      tpu.vector_store %arg7[%c0_12, %c0_13], %15 {strides = array<i32>} : memref<8x128xf32, #tpu.memory_space<vmem>>, vector<8x128xf32>,
    } else {
    }
    return
  }
  func.func @transform_0(%arg0: i32, %arg1: i32, %arg2: i32) -> (i32, i32) {
    %c0_i32 = arith.constant 0 : i32
    return %arg0, %arg2 : i32, i32
  }
  func.func @transform_1(%arg0: i32, %arg1: i32, %arg2: i32) -> (i32, i32) {
    %c0_i32 = arith.constant 0 : i32
    return %arg2, %arg1 : i32, i32
  }
  func.func @transform_2(%arg0: i32, %arg1: i32, %arg2: i32) -> (i32, i32) {
    %c0_i32 = arith.constant 0 : i32
    %c0_i32_0 = arith.constant 0 : i32
    return %c0_i32, %arg1 : i32, i32
  }
  func.func @transform_3(%arg0: i32, %arg1: i32, %arg2: i32) -> (i32, i32) {
    %c0_i32 = arith.constant 0 : i32
    return %arg0, %arg1 : i32, i32
  }
  func.func @transform_4(%arg0: i32, %arg1: i32, %arg2: i32) -> (i32, i32) {
    %c0_i32 = arith.constant 0 : i32
    return %arg0, %arg1 : i32, i32
  }
}

</mosaic_0001>

<llo_original>
// kernel: tpu_custom_call.1
$region0: #{tpu_custom_call.1}
  #allocation0 [shape = 'u32[]', space=smem, size = 0x4, offset = 0x4, fixed_abs, tag = 'smem constant byte address 0x4 - core index']
  #allocation1 [shape = 'u32[144,128]{1,0:T(1,128)}', space=vmem, size = 0x12000, scoped, tag = 'internal scratch']
  %s0 = inlined_call_operand.hbm [shape: bf16[16,128], index: 0, kind: input, shape index: {}]
  %s1 = inlined_call_operand.hbm [shape: bf16[128,128], index: 1, kind: input, shape index: {}]
  %s2 = inlined_call_operand.vmem [shape: f32[1,128], index: 2, kind: input, shape index: {}]
  %s3 = inlined_call_operand.vmem [shape: bf16[16,128], index: 3, kind: input, shape index: {}]
  %s4 = inlined_call_operand.hbm [shape: f32[16,128], index: 4, kind: output, shape index: {}]
  %s5 = sld [smem:[#allocation0]]
  $region69: #{tpu_custom_call.1} parent=0
    _
  %s7 = ssub.s32 1, %s5
  %s8 = scalar_select 0, %s7, %s5
  $region1: #{tpu_custom_call.1} parent=0
    #allocation2 [shape = 'u8[4096]{0}', space=vmem, size = 0x1000, scoped, tag = 'input window, operand 0']
    #allocation3 [shape = 's32[2]{0}', space=sflag, size = 0x8, scoped, tag = 'scoped memory for tpu_custom_call.1']
    #allocation4 [shape = 's32[2]{0}', space=sflag, size = 0x8, scoped, tag = 'scoped memory for tpu_custom_call.1']
    #allocation5 [shape = 'u8[32768]{0}', space=vmem, size = 0x8000, scoped, tag = 'input window, operand 1, single buffered']
    #allocation6 [shape = 's32[1]{0}', space=sflag, size = 0x4, scoped, tag = 'scoped memory for tpu_custom_call.1']
    #allocation7 [shape = 'u8[8192]{0}', space=vmem, size = 0x2000, scoped, tag = 'output window, operand 0']
    %9 = vsyncpa [#allocation3], 0
    %s10 = scalar_lea.sflag [#allocation3], 1
    %11 = vsyncpa %s10, 0
    %12 = vsyncpa [#allocation6], 0
    %13 = vsyncpa [#allocation4], 0
    %s14 = scalar_lea.sflag [#allocation4], 1
    %15 = vsyncpa %s14, 0
    loop: start=0, step=1, limit=4
    $region2: #{tpu_custom_call.1} parent=1 // loop_pre_header
      _
    $region3: #{tpu_custom_call.1} parent=1 // loop_header
      %s17 = sphi 0, %s21
      %p18 = scmp.ge.s32.totalorder %s17, 4
      %s24 = sphi 0, %s43
      %s25 = sphi 0, %s39
      %s26 = sphi 0, %s35
      %s27 = sphi 0, %s24
      %s28 = sphi 0, %s25
      %s29 = sphi 0, %s26
      %s30 = sphi 0, %s27
      %s31 = sphi 0, %s28
      %s32 = sphi 0, %s29
      %s48 = sphi 0, %s50
      %s51 = sphi 0, %s48
      %s52 = sphi 0, %s51
      %s68 = sphi 0, %s52
      %s76 = sphi 0, %s78
      %s79 = sphi 0, %s76
      %s80 = sphi 0, %s79
      %s96 = sphi 0, %s80
      %s102 = sphi 0, %s104
      %s105 = sphi 0, %s102
      %s106 = sphi 0, %s105
      %s122 = sphi 0, %s106
      %s130 = sphi 0, %s132
      %s133 = sphi 0, %s130
      %s134 = sphi 0, %s133
      %s150 = sphi 0, %s134
      %s158 = sphi 0, %s160
      %s161 = sphi 0, %s158
      %s162 = sphi 0, %s161
      %s178 = sphi 0, %s162
    $region4: #{tpu_custom_call.1} parent=1 // loop_header_branch
      %20 = sbr.rel (%p18) target = $region8
    $region5: #{tpu_custom_call.1} parent=1 // loop_body
      %s22 = ssub.s32 %s17, 1
      %s23 = ssub.s32 %s17, 2
      %s33 = sadd.s32 1, %s26
      %p34 = scmp.ge.s32.totalorder %s33, 1
      %s35 = scalar_select %p34, 0, %s33
      %s36 = sadd.s32 1, %s25
      %s37 = scalar_select %p34, %s36, %s25
      %p38 = scmp.ge.s32.totalorder %s37, 1
      %s39 = scalar_select %p38, 0, %s37
      %s40 = sadd.s32 1, %s24
      %s41 = scalar_select %p38, %s40, %s24
      %p42 = scmp.ge.s32.totalorder %s41, 2
      %s43 = scalar_select %p42, 0, %s41
      %s44 = ssub.s32 %s24, %s43
      %s45 = ssub.s32 %s26, %s35
      %s46 = sor.u32 %s44, %s45
      %p47 = scmp.eq.s32.totalorder %s46, 0
      %s49 = sadd.s32 %s48, 1
      %s50 = scalar_select %p47, %s48, %s49
      %p53 = pneg %p47
      %p54 = scmp.eq.s32.totalorder %s17, 1
      %p55 = por %p53, %p54
      %p56 = scmp.ne.s32.totalorder %s48, %s51
      %p57 = scmp.eq.s32.totalorder %s17, 0
      %p58 = por %p56, %p57
      %p59 = scmp.ne.s32.totalorder %s48, %s51
      %p60 = scmp.eq.s32.totalorder %s22, 1
      %p61 = por %p59, %p60
      %p62 = scmp.ne.s32.totalorder %s51, %s52
      %p63 = scmp.eq.s32.totalorder %s22, 0
      %p64 = por %p62, %p63
      %p65 = scmp.ne.s32.totalorder %s51, %s52
      %p66 = scmp.eq.s32.totalorder %s23, 1
      %p67 = por %p65, %p66
      %p69 = scmp.ne.s32.totalorder %s52, %s68
      %p70 = scmp.eq.s32.totalorder %s23, 0
      %p71 = por %p69, %p70
      %s72 = ssub.s32 %s26, %s35
      %s73 = ssub.s32 %s25, %s39
      %s74 = sor.u32 %s72, %s73
      %p75 = scmp.eq.s32.totalorder %s74, 0
      %s77 = sadd.s32 %s76, 1
      %s78 = scalar_select %p75, %s76, %s77
      %p81 = pneg %p75
      %p82 = scmp.eq.s32.totalorder %s17, 1
      %p83 = por %p81, %p82
      %p84 = scmp.ne.s32.totalorder %s76, %s79
      %p85 = scmp.eq.s32.totalorder %s17, 0
      %p86 = por %p84, %p85
      %p87 = scmp.ne.s32.totalorder %s76, %s79
      %p88 = scmp.eq.s32.totalorder %s22, 1
      %p89 = por %p87, %p88
      %p90 = scmp.ne.s32.totalorder %s79, %s80
      %p91 = scmp.eq.s32.totalorder %s22, 0
      %p92 = por %p90, %p91
      %p93 = scmp.ne.s32.totalorder %s79, %s80
      %p94 = scmp.eq.s32.totalorder %s23, 1
      %p95 = por %p93, %p94
      %p97 = scmp.ne.s32.totalorder %s80, %s96
      %p98 = scmp.eq.s32.totalorder %s23, 0
      %p99 = por %p97, %p98
      %s100 = ssub.s32 %s25, %s39
      %p101 = scmp.eq.s32.totalorder %s100, 0
      %s103 = sadd.s32 %s102, 1
      %s104 = scalar_select %p101, %s102, %s103
      %p107 = pneg %p101
      %p108 = scmp.eq.s32.totalorder %s17, 1
      %p109 = por %p107, %p108
      %p110 = scmp.ne.s32.totalorder %s102, %s105
      %p111 = scmp.eq.s32.totalorder %s17, 0
      %p112 = por %p110, %p111
      %p113 = scmp.ne.s32.totalorder %s102, %s105
      %p114 = scmp.eq.s32.totalorder %s22, 1
      %p115 = por %p113, %p114
      %p116 = scmp.ne.s32.totalorder %s105, %s106
      %p117 = scmp.eq.s32.totalorder %s22, 0
      %p118 = por %p116, %p117
      %p119 = scmp.ne.s32.totalorder %s105, %s106
      %p120 = scmp.eq.s32.totalorder %s23, 1
      %p121 = por %p119, %p120
      %p123 = scmp.ne.s32.totalorder %s106, %s122
      %p124 = scmp.eq.s32.totalorder %s23, 0
      %p125 = por %p123, %p124
      %s126 = ssub.s32 %s24, %s43
      %s127 = ssub.s32 %s25, %s39
      %s128 = sor.u32 %s126, %s127
      %p129 = scmp.eq.s32.totalorder %s128, 0
      %s131 = sadd.s32 %s130, 1
      %s132 = scalar_select %p129, %s130, %s131
      %p135 = pneg %p129
      %p136 = scmp.eq.s32.totalorder %s17, 1
      %p137 = por %p135, %p136
      %p138 = scmp.ne.s32.totalorder %s130, %s133
      %p139 = scmp.eq.s32.totalorder %s17, 0
      %p140 = por %p138, %p139
      %p141 = scmp.ne.s32.totalorder %s130, %s133
      %p142 = scmp.eq.s32.totalorder %s22, 1
      %p143 = por %p141, %p142
      %p144 = scmp.ne.s32.totalorder %s133, %s134
      %p145 = scmp.eq.s32.totalorder %s22, 0
      %p146 = por %p144, %p145
      %p147 = scmp.ne.s32.totalorder %s133, %s134
      %p148 = scmp.eq.s32.totalorder %s23, 1
      %p149 = por %p147, %p148
      %p151 = scmp.ne.s32.totalorder %s134, %s150
      %p152 = scmp.eq.s32.totalorder %s23, 0
      %p153 = por %p151, %p152
      %s154 = ssub.s32 %s24, %s43
      %s155 = ssub.s32 %s25, %s39
      %s156 = sor.u32 %s154, %s155
      %p157 = scmp.eq.s32.totalorder %s156, 0
      %s159 = sadd.s32 %s158, 1
      %s160 = scalar_select %p157, %s158, %s159
      %p163 = pneg %p157
      %p164 = scmp.eq.s32.totalorder %s17, 1
      %p165 = por %p163, %p164
      %p166 = scmp.ne.s32.totalorder %s158, %s161
      %p167 = scmp.eq.s32.totalorder %s17, 0
      %p168 = por %p166, %p167
      %p169 = scmp.ne.s32.totalorder %s158, %s161
      %p170 = scmp.eq.s32.totalorder %s22, 1
      %p171 = por %p169, %p170
      %p172 = scmp.ne.s32.totalorder %s161, %s162
      %p173 = scmp.eq.s32.totalorder %s22, 0
      %p174 = por %p172, %p173
      %p175 = scmp.ne.s32.totalorder %s161, %s162
      %p176 = scmp.eq.s32.totalorder %s23, 1
      %p177 = por %p175, %p176
      %p179 = scmp.ne.s32.totalorder %s162, %s178
      %p180 = scmp.eq.s32.totalorder %s23, 0
      %p181 = por %p179, %p180
      %p182 = scmp.le.s32.totalorder 1, %s17
      %p183 = scmp.lt.s32.totalorder %s17, 3
      %p184 = pnand %p182, %p183
      %p185 = pneg %p184
      // Predicated region
      $region9: #{tpu_custom_call.1} parent=5 // pred_check
        _
      $region10: #{tpu_custom_call.1} parent=5 // pred_check_branch
        %187 = sbr.rel (%p184) target = $region12
      $region11: #{tpu_custom_call.1} parent=5 // pred_region
        %s188 = ssub.s32 %s17, 1
        // Predicated region
        $region13: #{tpu_custom_call.1} parent=11 // pred_check
          %p189 = pneg %p92
        $region14: #{tpu_custom_call.1} parent=11 // pred_check_branch
          %191 = sbr.rel (%p189) target = $region16
        $region15: #{tpu_custom_call.1} parent=11 // pred_region
          %s192 = smul.u32 16, %s29
          %s194 = ssub.s32 1024, 1024
          %195 = vsyncadd [#allocation6], %s194
          %s196 = sadd.s32 %s28, %s192
          %s197 = smul.addr %s196, 64
          %s198 = scalar_lea.hbm %s1, %s197
          %s199 = sshll.u32 [#allocation5], 4
          %s200 = int_to_ptr.vmem [resolvable:$true] %s199
          %205 = dma.hbm_to_vmem [thread:$0]  %s198, 1024, %s200, [#allocation6], 64, 64, 4
        $region16: #{tpu_custom_call.1} parent=11 // pred_fallthru
          _
        // Predicated region
        $region17: #{tpu_custom_call.1} parent=11 // pred_check
          %p206 = pneg %p118
        $region18: #{tpu_custom_call.1} parent=11 // pred_check_branch
          %208 = sbr.rel (%p206) target = $region20
        $region19: #{tpu_custom_call.1} parent=11 // pred_region
          %p209 = scmp.lt.s32.totalorder %s28, 0
          %s210 = scalar_select %p209, %s28, 0
          %s211 = scalar_lea.vmem %s2, %s210
        $region20: #{tpu_custom_call.1} parent=11 // pred_fallthru
          _
      $region12: #{tpu_custom_call.1} parent=5 // pred_fallthru
        _
      %p212 = scmp.lt.s32.totalorder %s17, 2
      // Predicated region
      $region21: #{tpu_custom_call.1} parent=5 // pred_check
        %p213 = pneg %p212
      $region22: #{tpu_custom_call.1} parent=5 // pred_check_branch
        %215 = sbr.rel (%p213) target = $region24
      $region23: #{tpu_custom_call.1} parent=5 // pred_region
        // Predicated region
        $region25: #{tpu_custom_call.1} parent=23 // pred_check
          %p216 = pneg %p58
        $region26: #{tpu_custom_call.1} parent=23 // pred_check_branch
          %218 = sbr.rel (%p216) target = $region28
        $region27: #{tpu_custom_call.1} parent=23 // pred_region
          %s219 = sand.u32 %s48, 1
          %s220 = scalar_lea.sflag [#allocation3], %s219
          %s221 = sand.u32 %s48, 1
          %s222 = smul.addr %s221, 4
          %s223 = scalar_lea.vmem [#allocation2], %s222
          %s225 = ssub.s32 64, 64
          %226 = vsyncadd %s220, %s225
          %s227 = sadd.s32 %s26, %s24
          %s228 = smul.addr %s227, 64
          %s229 = scalar_lea.hbm %s0, %s228
          %s231 = sshll.u32 %s223, 4
          %s232 = int_to_ptr.vmem [resolvable:$true] %s231
          %234 = dma.hbm_to_vmem [thread:$0]  %s229, 64, %s232, %s220
        $region28: #{tpu_custom_call.1} parent=23 // pred_fallthru
          _
        // Predicated region
        $region29: #{tpu_custom_call.1} parent=23 // pred_check
          %p235 = pneg %p140
        $region30: #{tpu_custom_call.1} parent=23 // pred_check_branch
          %237 = sbr.rel (%p235) target = $region32
        $region31: #{tpu_custom_call.1} parent=23 // pred_region
          %p238 = scmp.lt.s32.totalorder %s24, 1
          %s239 = scalar_select %p238, %s24, 1
          %p240 = scmp.lt.s32.totalorder %s25, 0
          %s241 = scalar_select %p240, %s25, 0
          %s242 = sadd.s32 %s241, %s239
          %s243 = smul.addr %s242, 4
          %s244 = scalar_lea.vmem %s3, %s243
        $region32: #{tpu_custom_call.1} parent=23 // pred_fallthru
          _
      $region24: #{tpu_custom_call.1} parent=5 // pred_fallthru
        _
      %p245 = scmp.le.s32.totalorder 1, %s17
      %p246 = scmp.lt.s32.totalorder %s17, 3
      %p247 = pnand %p245, %p246
      %p248 = pneg %p247
      // Predicated region
      $region33: #{tpu_custom_call.1} parent=5 // pred_check
        _
      $region34: #{tpu_custom_call.1} parent=5 // pred_check_branch
        %250 = sbr.rel (%p247) target = $region36
      $region35: #{tpu_custom_call.1} parent=5 // pred_region
        %s251 = ssub.s32 %s17, 1
        %s252 = sand.u32 %s51, 1
        %s253 = scalar_lea.sflag [#allocation3], %s252
        %s254 = sand.u32 %s51, 1
        %s255 = smul.addr %s254, 4
        %s256 = scalar_lea.vmem [#allocation2], %s255
        // Predicated region
        $region37: #{tpu_custom_call.1} parent=35 // pred_check
          %p257 = pneg %p64
        $region38: #{tpu_custom_call.1} parent=35 // pred_check_branch
          %259 = sbr.rel (%p257) target = $region40
        $region39: #{tpu_custom_call.1} parent=35 // pred_region
          %260 = dma.done %s253, 64
        $region40: #{tpu_custom_call.1} parent=35 // pred_fallthru
          _
        // Predicated region
        $region41: #{tpu_custom_call.1} parent=35 // pred_check
          %p261 = pneg %p92
        $region42: #{tpu_custom_call.1} parent=35 // pred_check_branch
          %263 = sbr.rel (%p261) target = $region44
        $region43: #{tpu_custom_call.1} parent=35 // pred_region
          %264 = dma.done [#allocation6], 1024
        $region44: #{tpu_custom_call.1} parent=35 // pred_fallthru
          _
        %s265 = sand.u32 %s51, 1
        %s266 = scalar_lea.sflag [#allocation3], %s265
        %s267 = sand.u32 %s51, 1
        %s268 = smul.addr %s267, 4
        %s269 = scalar_lea.vmem [#allocation2], %s268
        %p270 = pneg %p64
        %p271 = pneg %p61
        %p272 = pneg %p92
        %p273 = pneg %p89
        %p274 = scmp.lt.s32.totalorder %s28, 0
        %s275 = scalar_select %p274, %s28, 0
        %s276 = scalar_lea.vmem %s2, %s275
        %p277 = pneg %p118
        %p278 = pneg %p115
        %p279 = scmp.lt.s32.totalorder %s27, 1
        %s280 = scalar_select %p279, %s27, 1
        %p281 = scmp.lt.s32.totalorder %s28, 0
        %s282 = scalar_select %p281, %s28, 0
        %s283 = sadd.s32 %s282, %s280
        %s284 = smul.addr %s283, 4
        %s285 = scalar_lea.vmem %s3, %s284
        %p286 = pneg %p146
        %p287 = pneg %p143
        %p288 = pneg %p174
        %p289 = pneg %p171
        %s290 = sand.u32 %s161, 1
        %s291 = scalar_lea.sflag [#allocation4], %s290
        %s292 = sand.u32 %s161, 1
        %s293 = smul.addr %s292, 8
        %s294 = scalar_lea.vmem [#allocation7], %s293
        %s295 = smul.u32 16, %s29
        %p296 = scmp.lt.s32.totalorder %s28, 0
        %s297 = scalar_select %p296, %s28, 0
        %s298 = scalar_lea.vmem %s2, %s297
        %p299 = scmp.lt.s32.totalorder %s27, 1
        %s300 = scalar_select %p299, %s27, 1
        %p301 = scmp.lt.s32.totalorder %s28, 0
        %s302 = scalar_select %p301, %s28, 0
        %s303 = sadd.s32 %s302, %s300
        %s304 = smul.addr %s303, 4
        %s305 = scalar_lea.vmem %s3, %s304
        %v307 = vld [vmem:[%s256] sm:$0xf]
        %v308 = vld [vmem:[#allocation5] sm:$0xf]
        %v309 = vld [vmem:[#allocation5 + $0x4] sm:$0xf]
        %v310 = vld [vmem:[#allocation5 + $0x8] sm:$0xf]
        %v311 = vld [vmem:[#allocation5 + $0xc] sm:$0xf]
        %v312 = vld [vmem:[#allocation5 + $0x10] sm:$0xf]
        %v313 = vld [vmem:[#allocation5 + $0x14] sm:$0xf]
        %v314 = vld [vmem:[#allocation5 + $0x18] sm:$0xf]
        %v315 = vld [vmem:[#allocation5 + $0x1c] sm:$0xf]
        %v316 = vld [vmem:[#allocation5 + $0x20] sm:$0xf]
        %v317 = vld [vmem:[#allocation5 + $0x24] sm:$0xf]
        %v318 = vld [vmem:[#allocation5 + $0x28] sm:$0xf]
        %v319 = vld [vmem:[#allocation5 + $0x2c] sm:$0xf]
        %v320 = vld [vmem:[#allocation5 + $0x30] sm:$0xf]
        %v321 = vld [vmem:[#allocation5 + $0x34] sm:$0xf]
        %v322 = vld [vmem:[#allocation5 + $0x38] sm:$0xf]
        %v323 = vld [vmem:[#allocation5 + $0x3c] sm:$0xf]
        %v340 = vunpack.c.l.b16 %v308
        %v341 = vunpack.c.l.b16 %v309
        %v342 = vunpack.c.l.b16 %v310
        %v343 = vunpack.c.l.b16 %v311
        %v344 = vunpack.c.l.b16 %v312
        %v345 = vunpack.c.l.b16 %v313
        %v346 = vunpack.c.l.b16 %v314
        %v347 = vunpack.c.l.b16 %v315
        %v348 = vunpack.c.l.b16 %v316
        %v349 = vunpack.c.l.b16 %v317
        %v350 = vunpack.c.l.b16 %v318
        %v351 = vunpack.c.l.b16 %v319
        %v352 = vunpack.c.l.b16 %v320
        %v353 = vunpack.c.l.b16 %v321
        %v354 = vunpack.c.l.b16 %v322
        %v355 = vunpack.c.l.b16 %v323
        %v356 = vpack.c.b16 %v341, %v340
        %v357 = vpack.c.b16 %v343, %v342
        %v358 = vpack.c.b16 %v345, %v344
        %v359 = vpack.c.b16 %v347, %v346
        %v360 = vpack.c.b16 %v349, %v348
        %v361 = vpack.c.b16 %v351, %v350
        %v362 = vpack.c.b16 %v353, %v352
        %v363 = vpack.c.b16 %v355, %v354
        %372 = vmatprep.subr.bf16.mxu0 0
        %373 = vmatpush1.bf16.msra.mxu0 %v356
        %374 = vmatprep.subr.bf16.mxu0 0
        %375 = vmatpush1.bf16.msra.mxu0 %v357
        %376 = vmatprep.subr.bf16.mxu0 0
        %377 = vmatpush1.bf16.msra.mxu0 %v358
        %378 = vmatprep.subr.bf16.mxu0 0
        %379 = vmatpush1.bf16.msra.mxu0 %v359
        %380 = vmatprep.subr.bf16.mxu0 0
        %381 = vmatpush1.bf16.msra.mxu0 %v360
        %382 = vmatprep.subr.bf16.mxu0 0
        %383 = vmatpush1.bf16.msra.mxu0 %v361
        %384 = vmatprep.subr.bf16.mxu0 0
        %385 = vmatpush1.bf16.msra.mxu0 %v362
        %386 = vmatprep.subr.bf16.mxu0 0
        %387 = vmatpush1.bf16.msra.mxu0 %v363
        %388 = vmatprep.subr.bf16.mxu0 0
        %389 = vmatpush1.bf16.msra.mxu0 0
        %390 = vmatprep.subr.bf16.mxu0 0
        %391 = vmatpush1.bf16.msra.mxu0 0
        %392 = vmatprep.subr.bf16.mxu0 0
        %393 = vmatpush1.bf16.msra.mxu0 0
        %394 = vmatprep.subr.bf16.mxu0 0
        %395 = vmatpush1.bf16.msra.mxu0 0
        %396 = vmatprep.subr.bf16.mxu0 0
        %397 = vmatpush1.bf16.msra.mxu0 0
        %398 = vmatprep.subr.bf16.mxu0 0
        %399 = vmatpush1.bf16.msra.mxu0 0
        %400 = vmatprep.subr.bf16.mxu0 0
        %401 = vmatpush1.bf16.msra.mxu0 0
        %402 = vmatprep.subr.bf16.mxu0 0
        %403 = vmatpush1.bf16.msra.mxu0 0
        %404 = vmatprep.mubr.bf16.mxu0 0
        %405 = vmatmul.mubr.bf16.gmra.mrb[0].mxu0 %v307
        %v406 = vpop.f32.mrb[0].mxu0
        %v407 = vadd.f32 0.0, %v406
        %v408 = vpop.f32.mrb[0].mxu0
        %v409 = vpop.f32.mrb[0].mxu0
        %v410 = vpop.f32.mrb[0].mxu0
        %411 = vdwg.mxu0
        %p412 = scmp.eq.s32.totalorder %s29, 0
        // Predicated region
        $region45: #{tpu_custom_call.1} parent=35 // pred_check
          %p413 = pneg %p412
        $region46: #{tpu_custom_call.1} parent=35 // pred_check_branch
          %415 = sbr.rel (%p413) target = $region48
        $region47: #{tpu_custom_call.1} parent=35 // pred_region
          %v416 = vld [vmem:[%s298] sm:$0x1]
          %v418 = vlaneseq
          %v419 = vshrl.u32 %v418, 7
          %v420 = vsub.s32 0, %v419
          %v421 = vrot.slane %v416, %v420
          %v423 = vadd.f32 %v407, %v421
          %424 = vst [vmem:[%s294] sm:$0xff] %v423
        $region48: #{tpu_custom_call.1} parent=35 // pred_fallthru
          _
        %p425 = scmp.gt.s32.totalorder %s29, 0
        // Predicated region
        $region49: #{tpu_custom_call.1} parent=35 // pred_check
          %p426 = pneg %p425
        $region50: #{tpu_custom_call.1} parent=35 // pred_check_branch
          %428 = sbr.rel (%p426) target = $region52
        $region51: #{tpu_custom_call.1} parent=35 // pred_region
          %v429 = vld [vmem:[%s294] sm:$0xff]
          %v430 = vadd.f32 %v429, %v407
          %431 = vst [vmem:[%s294] sm:$0xff] %v430
        $region52: #{tpu_custom_call.1} parent=35 // pred_fallthru
          _
        // Predicated region
        $region53: #{tpu_custom_call.1} parent=35 // pred_check
          %p432 = pneg %p412
        $region54: #{tpu_custom_call.1} parent=35 // pred_check_branch
          %434 = sbr.rel (%p432) target = $region56
        $region55: #{tpu_custom_call.1} parent=35 // pred_region
          %v435 = vld [vmem:[%s294] sm:$0xff]
          %v436 = vld [vmem:[%s305] sm:$0xf]
          %v437 = vunpack.c.l.bf16 %v436
          %v438 = vadd.f32 %v435, %v437
          %439 = vst [vmem:[%s294] sm:$0xff] %v438
        $region56: #{tpu_custom_call.1} parent=35 // pred_fallthru
          _
        %s440 = sand.u32 %s161, 1
        %s441 = scalar_lea.sflag [#allocation4], %s440
        %s442 = sand.u32 %s161, 1
        %s443 = smul.addr %s442, 8
        %s444 = scalar_lea.vmem [#allocation7], %s443
        // Predicated region
        $region57: #{tpu_custom_call.1} parent=35 // pred_check
          %p445 = pneg %p171
        $region58: #{tpu_custom_call.1} parent=35 // pred_check_branch
          %447 = sbr.rel (%p445) target = $region60
        $region59: #{tpu_custom_call.1} parent=35 // pred_region
          %s449 = ssub.s32 128, 128
          %450 = vsyncadd %s441, %s449
          %s451 = sadd.s32 %s28, %s27
          %s452 = smul.addr %s451, 128
          %s453 = scalar_lea.hbm %s4, %s452
          %s455 = sshll.u32 %s444, 4
          %s456 = int_to_ptr.vmem [resolvable:$true] %s455
          %458 = dma.vmem_to_hbm [thread:$0]  %s456, 128, %s453, %s441
        $region60: #{tpu_custom_call.1} parent=35 // pred_fallthru
          _
      $region36: #{tpu_custom_call.1} parent=5 // pred_fallthru
        _
      %p459 = scmp.le.s32.totalorder 2, %s17
      // Predicated region
      $region61: #{tpu_custom_call.1} parent=5 // pred_check
        %p460 = pneg %p459
      $region62: #{tpu_custom_call.1} parent=5 // pred_check_branch
        %462 = sbr.rel (%p460) target = $region64
      $region63: #{tpu_custom_call.1} parent=5 // pred_region
        %s463 = ssub.s32 %s17, 2
        // Predicated region
        $region65: #{tpu_custom_call.1} parent=63 // pred_check
          %p464 = pneg %p177
        $region66: #{tpu_custom_call.1} parent=63 // pred_check_branch
          %466 = sbr.rel (%p464) target = $region68
        $region67: #{tpu_custom_call.1} parent=63 // pred_region
          %s467 = sand.u32 %s162, 1
          %s468 = scalar_lea.sflag [#allocation4], %s467
          %s469 = sand.u32 %s162, 1
          %s470 = smul.addr %s469, 8
          %s471 = scalar_lea.vmem [#allocation7], %s470
          %472 = dma.done %s468, 128
        $region68: #{tpu_custom_call.1} parent=63 // pred_fallthru
          _
      $region64: #{tpu_custom_call.1} parent=5 // pred_fallthru
        _
    $region6: #{tpu_custom_call.1} parent=1 // loop_footer
      %s21 = sadd.s32 1, %s17
    $region7: #{tpu_custom_call.1} parent=1 // loop_footer_branch
      %16 = sbr.rel target = $region3
    $region8: #{tpu_custom_call.1} parent=1 // loop_exit
      _
    %473 = vsyncpa [#allocation3], 1
    %s474 = scalar_lea.sflag [#allocation3], 1
    %475 = vsyncpa %s474, 1
    %476 = vsyncpa [#allocation6], 1
    %477 = vsyncpa [#allocation4], 1
    %s478 = scalar_lea.sflag [#allocation4], 1
    %479 = vsyncpa %s478, 1

</llo_original>
